<compile_context>
chip_gen: v5e
topology: v5e:2x2
jax: 0.10.0
libtpu: 0.0.40
codegen_flags: <defaults>
</compile_context>

<pallas_src>
import functools

import jax
import jax.numpy as jnp
from jax import lax
from jax.experimental import pallas as pl
from jax.experimental.pallas import tpu as pltpu


# ----------------------------------------------------------------------------
# helpers
# ----------------------------------------------------------------------------
def _round_up(x, m):
    return ((x + m - 1) // m) * m


def _pick_seq_tile(s, cap=256):
    # bf16 packs 16 rows per sublane group -> seq tiles are multiples of 16.
    return min(cap, _round_up(s, 16))


def _pick_out_tile(dout, cap=512):
    # largest multiple of 128 that divides dout and is <= cap; else full dout.
    best = None
    for t in range(128, min(cap, dout) + 1, 128):
        if dout % t == 0:
            best = t
    return best if best is not None else dout


# ----------------------------------------------------------------------------
# Pallas kernels
# ----------------------------------------------------------------------------
def _linear_kernel(x_ref, w_ref, b_ref, o_ref, *, compute_dtype):
    # x_ref: (1, tm, Din)  w_ref: (Din, tn)  b_ref: (1, tn) f32  o_ref: (1, tm, tn)
    x = x_ref[0].astype(compute_dtype)                   # no-op when already bf16
    w = w_ref[...]                                       # stored in compute dtype
    y = jnp.dot(x, w, preferred_element_type=jnp.float32)    # f32 accumulation
    y = y + b_ref[...]                                   # (1, tn) broadcast
    o_ref[0] = y.astype(o_ref.dtype)


def _flash_attention_kernel(*refs, num_heads, head_dim, kv_len, seq_padded,
                            has_mask, compute_dtype, approx_recip):
    if has_mask:
        q_ref, k_ref, v_ref, m_ref, o_ref, m_sc, l_sc, acc_sc = refs
    else:
        q_ref, k_ref, v_ref, o_ref, m_sc, l_sc, acc_sc = refs
        m_ref = None

    H, Dh = num_heads, head_dim
    ki = pl.program_id(2)

    @pl.when(ki == 0)
    def _():
        m_sc[...] = jnp.full_like(m_sc, -jnp.inf)
        l_sc[...] = jnp.zeros_like(l_sc)
        acc_sc[...] = jnp.zeros_like(acc_sc)

    q = q_ref[0]                                          # (tq, D), scale pre-folded
    k = k_ref[0]                                          # (tk, D)
    v = v_ref[0]                                          # (tk, D)
    tq, tk = q.shape[0], k.shape[0]

    # Head split into a leading batch dim: one stack per tensor feeding a single
    # batched MXU op (instead of H narrow matmuls + H masked output stores).
    q3 = jnp.stack([q[:, h * Dh:(h + 1) * Dh] for h in range(H)], axis=0)
    k3 = jnp.stack([k[:, h * Dh:(h + 1) * Dh] for h in range(H)], axis=0)
    v3 = jnp.stack([v[:, h * Dh:(h + 1) * Dh] for h in range(H)], axis=0)
    q3 = q3.astype(compute_dtype)
    k3 = k3.astype(compute_dtype)
    v3 = v3.astype(compute_dtype)

    # scores: (H, tq, tk), f32 accumulation (batched over heads on the MXU)
    s = jnp.einsum("hqd,hkd->hqk", q3, k3, preferred_element_type=jnp.float32)

    # additive bias: user mask (+) static key-padding mask (when S was padded)
    bias = None
    if m_ref is not None:
        bias = m_ref[0, 0].astype(jnp.float32)            # (tq, tk)
    if kv_len < seq_padded:                               # static Python condition
        kv_pos = ki * tk + lax.broadcasted_iota(jnp.int32, (tq, tk), 1)
        pad = jnp.where(kv_pos < kv_len, 0.0, -1e30).astype(jnp.float32)
        bias = pad if bias is None else bias + pad
    if bias is not None:
        s = s + bias[None, :, :]

    # online softmax (f32 stats, matches torch softmax(dtype=float32))
    m_prev = m_sc[...]                                    # (H, tq, 1)
    m_cur = jnp.max(s, axis=-1, keepdims=True)
    m_new = jnp.maximum(m_prev, m_cur)
    alpha = jnp.exp(m_prev - m_new)
    p = jnp.exp(s - m_new)                                # (H, tq, tk) f32
    l_sc[...] = alpha * l_sc[...] + jnp.sum(p, axis=-1, keepdims=True)
    pv = jnp.einsum("hqk,hkd->hqd", p.astype(compute_dtype), v3,
                    preferred_element_type=jnp.float32)   # (H, tq, Dh)
    acc_sc[...] = alpha * acc_sc[...] + pv
    m_sc[...] = m_new

    @pl.when(ki == pl.num_programs(2) - 1)
    def _():
        inv_l = pl.reciprocal(l_sc[...], approx=approx_recip)   # (H, tq, 1)
        o3 = acc_sc[...] * inv_l                                # (H, tq, Dh)
        # merge heads into one lane-dense (tq, D) value -> single unmasked store
        o = jnp.concatenate([o3[h] for h in range(H)], axis=-1)
        o_ref[0] = o.astype(o_ref.dtype)


# ----------------------------------------------------------------------------
# Pallas wrappers
# ----------------------------------------------------------------------------
def pallas_linear(x, w_t, b2, *, out_dtype, compute_dtype, seq_tile):
    """y = x @ w_t + b   with x:(B,Sp,Din), w_t:(Din,Dout), b2:(1,Dout) f32."""
    B, Sp, Din = x.shape
    Dout = w_t.shape[1]
    tm = seq_tile
    assert Sp % tm == 0
    tn = _pick_out_tile(Dout)
    kernel = functools.partial(_linear_kernel, compute_dtype=compute_dtype)
    # seq-tile axis is innermost and w's index_map is constant in it -> the
    # weight block stays resident in VMEM across the whole seq sweep.
    return pl.pallas_call(
        kernel,
        out_shape=jax.ShapeDtypeStruct((B, Sp, Dout), out_dtype),
        grid=(B, Dout // tn, Sp // tm),
        in_specs=[
            pl.BlockSpec((1, tm, Din), lambda bi, ni, si: (bi, si, 0)),
            pl.BlockSpec((Din, tn), lambda bi, ni, si: (0, ni)),
            pl.BlockSpec((1, tn), lambda bi, ni, si: (0, ni)),
        ],
        out_specs=pl.BlockSpec((1, tm, tn), lambda bi, ni, si: (bi, si, ni)),
        compiler_params=pltpu.CompilerParams(
            dimension_semantics=("parallel", "parallel", "parallel")),
    )(x, w_t, b2)


def pallas_flash_attention(qkv, mask, *, num_heads, head_dim, kv_len, out_dtype,
                           compute_dtype, approx_recip, seq_tile):
    """qkv: (B, Sp, 3*D) packed q|k|v.  mask: (B,1,Sp,Sp) additive or None.
    Returns (B, Sp, D) with heads already merged (lane-dense output)."""
    B, Sp, threeD = qkv.shape
    D = num_heads * head_dim
    assert threeD == 3 * D
    tq = tk = seq_tile
    assert Sp % tq == 0
    has_mask = mask is not None

    kernel = functools.partial(
        _flash_attention_kernel, num_heads=num_heads, head_dim=head_dim,
        kv_len=kv_len, seq_padded=Sp, has_mask=has_mask,
        compute_dtype=compute_dtype, approx_recip=approx_recip)

    if D % 128 == 0:
        # Fast path: read q/k/v tiles straight out of the packed qkv tensor by
        # passing it three times with different last-dim block indices.
        in_specs = [
            pl.BlockSpec((1, tq, D), lambda b, qi, ki: (b, qi, 0)),   # Q tile
            pl.BlockSpec((1, tk, D), lambda b, qi, ki: (b, ki, 1)),   # K tile
            pl.BlockSpec((1, tk, D), lambda b, qi, ki: (b, ki, 2)),   # V tile
        ]
        args = [qkv, qkv, qkv]
    else:
        # TODO(synk): pad the per-chunk width to 128 at the projection instead
        # of materializing three activation copies with jnp.split.
        q, k, v = jnp.split(qkv, 3, axis=-1)
        in_specs = [
            pl.BlockSpec((1, tq, D), lambda b, qi, ki: (b, qi, 0)),
            pl.BlockSpec((1, tk, D), lambda b, qi, ki: (b, ki, 0)),
            pl.BlockSpec((1, tk, D), lambda b, qi, ki: (b, ki, 0)),
        ]
        args = [q, k, v]

    if has_mask:
        in_specs.append(pl.BlockSpec((1, 1, tq, tk),
                                     lambda b, qi, ki: (b, 0, qi, ki)))
        args.append(mask)

    return pl.pallas_call(
        kernel,
        out_shape=jax.ShapeDtypeStruct((B, Sp, D), out_dtype),
        grid=(B, Sp // tq, Sp // tk),
        in_specs=in_specs,
        out_specs=pl.BlockSpec((1, tq, D), lambda b, qi, ki: (b, qi, 0)),
        scratch_shapes=[
            pltpu.VMEM((num_heads, tq, 1), jnp.float32),          # running max
            pltpu.VMEM((num_heads, tq, 1), jnp.float32),          # running sum
            pltpu.VMEM((num_heads, tq, head_dim), jnp.float32),   # accumulator
        ],
        compiler_params=pltpu.CompilerParams(
            dimension_semantics=("parallel", "parallel", "arbitrary")),
    )(*args)


# ----------------------------------------------------------------------------
# Module: parameter init + forward
# ----------------------------------------------------------------------------
class Idefics3VisionAttentionPallas:
    def __init__(self, hidden_size, num_attention_heads, key,
                 dtype=jnp.float32, use_bf16_mxu=True, seq_tile_cap=256):
        self.embed_dim = hidden_size
        self.num_heads = num_attention_heads
        self.head_size = hidden_size // num_attention_heads
        if self.head_size * self.num_heads != self.embed_dim:
            raise ValueError("embed_dim must be divisible by num_heads")
        self.scale = self.head_size ** (-0.5)
        self.dtype = dtype
        self.compute_dtype = jnp.bfloat16 if use_bf16_mxu else dtype
        self.approx_recip = bool(use_bf16_mxu)
        self.seq_tile_cap = seq_tile_cap

        k = jax.random.split(key, 4)
        D = self.embed_dim
        # reference-layout f32 params (same as the torch module)
        self.w_qkv = jax.random.normal(k[0], (3 * D, D), dtype) * 0.02
        self.b_qkv = jax.random.normal(k[1], (3 * D,), dtype) * 0.02
        self.w_out = jax.random.normal(k[2], (D, D), dtype) * 0.02
        self.b_out = jax.random.normal(k[3], (D,), dtype) * 0.02

        # kernel-layout copies: attention scale folded into the Q rows,
        # pre-transposed + cast to the MXU compute dtype (one-time).
        scale_col = jnp.ones((3 * D,), jnp.float32).at[:D].set(self.scale)
        w_qkv_scaled = self.w_qkv.astype(jnp.float32) * scale_col[:, None]
        self.w_qkv_t = w_qkv_scaled.T.astype(self.compute_dtype)          # (D, 3D)
        self.b_qkv_k = (self.b_qkv.astype(jnp.float32) * scale_col
                        ).reshape(1, 3 * D)                               # f32
        self.w_out_t = self.w_out.T.astype(self.compute_dtype)            # (D, D)
        self.b_out_k = self.b_out.astype(jnp.float32).reshape(1, D)       # f32

    def __call__(self, hidden_states, attention_mask=None):
        B, S, D = hidden_states.shape
        assert D == self.embed_dim
        H, Dh = self.num_heads, self.head_size

        tile = _pick_seq_tile(S, self.seq_tile_cap)
        Sp = _round_up(S, tile)

        # cast activations (and mask) to the compute dtype in the wrapper:
        # halves the HBM stream into the kernels in bf16 mode.
        x = hidden_states.astype(self.compute_dtype)
        if Sp != S:
            x = jnp.pad(x, ((0, 0), (0, Sp - S), (0, 0)))
        mask = attention_mask
        if mask is not None:
            assert mask.shape == (B, 1, S, S)
            mask = mask.astype(self.compute_dtype)
            if Sp != S:
                mask = jnp.pad(mask, ((0, 0), (0, 0), (0, Sp - S), (0, Sp - S)))

        # --- (1) fused qkv projection (scale pre-folded into Q weights) ---
        qkv = pallas_linear(x, self.w_qkv_t, self.b_qkv_k,
                            out_dtype=self.compute_dtype,
                            compute_dtype=self.compute_dtype,
                            seq_tile=tile)                       # (B, Sp, 3D)

        # --- (2) flash attention: head-batched, KV-tiled, lane-dense out ---
        attn = pallas_flash_attention(
            qkv, mask, num_heads=H, head_dim=Dh, kv_len=S,
            out_dtype=self.compute_dtype, compute_dtype=self.compute_dtype,
            approx_recip=self.approx_recip, seq_tile=tile)       # (B, Sp, D)

        # --- (3) output projection ---
        out = pallas_linear(attn, self.w_out_t, self.b_out_k,
                            out_dtype=hidden_states.dtype,
                            compute_dtype=self.compute_dtype,
                            seq_tile=tile)                       # (B, Sp, D)
        if Sp != S:
            out = out[:, :S, :]
        return out


# ----------------------------------------------------------------------------
# Pure-JAX f32 reference (semantics of the torch module)
# ----------------------------------------------------------------------------
def reference_forward(mod, x, mask):
    B, S, D = x.shape
    H, Dh = mod.num_heads, mod.head_size
    qkv = x @ mod.w_qkv.T + mod.b_qkv
    q, k, v = jnp.split(qkv, 3, axis=2)
    q = q.reshape(B, S, H, Dh).transpose(0, 2, 1, 3)
    k = k.reshape(B, S, H, Dh).transpose(0, 2, 1, 3)
    v = v.reshape(B, S, H, Dh).transpose(0, 2, 1, 3)
    s = jnp.einsum("bhqd,bhkd->bhqk", q, k) * mod.scale
    if mask is not None:
        s = s + mask
    p = jax.nn.softmax(s.astype(jnp.float32), axis=-1).astype(q.dtype)
    o = jnp.einsum("bhqk,bhkd->bhqd", p, v)
    o = o.transpose(0, 2, 1, 3).reshape(B, S, D)
    return o @ mod.w_out.T + mod.b_out


if __name__ == "__main__":
    # Small but tile-aligned shapes: batch=2, seq=128, hidden=128, heads=2 (Dh=64).
    B, S, D, H = 2, 128, 128, 2
    key = jax.random.PRNGKey(0)
    kp, kx, km, kx2 = jax.random.split(key, 4)

    x = jax.random.normal(kx, (B, S, D), jnp.float32)
    mask = 0.1 * jax.random.normal(km, (B, 1, S, S), jnp.float32)

    # (1) performance config: bf16 MXU inputs + approx reciprocal
    #     (loose tolerance vs. the f32 reference accounts for bf16 rounding).
    mod_fast = Idefics3VisionAttentionPallas(D, H, key=kp, use_bf16_mxu=True)
    out_fast = jax.block_until_ready(mod_fast(x, mask))
    ref = reference_forward(mod_fast, x, mask)
    assert out_fast.shape == (B, S, D)
    assert jnp.allclose(out_fast, ref, atol=2e-3, rtol=2e-2), "bf16 path mismatch"

    # (2) exact f32 config: tight check against the pure-JAX reference.
    mod_exact = Idefics3VisionAttentionPallas(D, H, key=kp, use_bf16_mxu=False)
    out_exact = jax.block_until_ready(mod_exact(x, mask))
    ref_exact = reference_forward(mod_exact, x, mask)
    assert jnp.allclose(out_exact, ref_exact, atol=1e-5, rtol=1e-5), "f32 path mismatch"

    # (3) mask=None and a seq length that needs padding (exercises the
    #     mask-free kernel variant and the in-kernel key-padding mask).
    S2 = 20
    x2 = jax.random.normal(kx2, (B, S2, D), jnp.float32)
    out2 = jax.block_until_ready(mod_exact(x2, None))
    ref2 = reference_forward(mod_exact, x2, None)
    assert out2.shape == (B, S2, D)
    assert jnp.allclose(out2, ref2, atol=1e-5, rtol=1e-5), "padded/no-mask mismatch"

    print("KERNEL_OK")
</pallas_src>

<mosaic_0001>
module attributes {stable_mosaic.version = 11 : i64} {
  func.func @_linear_kernel(%arg0: i32, %arg1: i32, %arg2: i32, %arg3: memref<1x128x128xbf16, #tpu.memory_space<vmem>>, %arg4: memref<128x384xbf16, #tpu.memory_space<vmem>>, %arg5: memref<1x384xf32, #tpu.memory_space<vmem>>, %arg6: memref<1x128x384xbf16, #tpu.memory_space<vmem>>) attributes {dimension_semantics = [#tpu.dimension_semantics<parallel>, #tpu.dimension_semantics<parallel>, #tpu.dimension_semantics<parallel>], iteration_bounds = array<i64: 2, 1, 1>, scalar_prefetch = 0 : i64, scratch_operands = 0 : i64, tpu.core_type = #tpu.core_type<tc>, window_params = [{transform_indices = @transform_0, window_bounds = array<i64: 1, 128, 128>}, {transform_indices = @transform_1, window_bounds = array<i64: 128, 384>}, {transform_indices = @transform_2, window_bounds = array<i64: 1, 384>}, {transform_indices = @transform_3, window_bounds = array<i64: 1, 128, 384>}]} {
    %c0 = arith.constant 0 : index
    %c0_0 = arith.constant 0 : index
    %c0_1 = arith.constant 0 : index
    %0 = vector.load %arg3[%c0, %c0_0, %c0_1] : memref<1x128x128xbf16, #tpu.memory_space<vmem>>, vector<1x128x128xbf16>
    %1 = vector.shape_cast %0 : vector<1x128x128xbf16> to vector<128x128xbf16>
    %c0_2 = arith.constant 0 : index
    %c0_3 = arith.constant 0 : index
    %2 = vector.load %arg4[%c0_2, %c0_3] : memref<128x384xbf16, #tpu.memory_space<vmem>>, vector<128x384xbf16>
    %cst = arith.constant dense<0.000000e+00> : vector<128x384xf32>
    %3 = tpu.matmul %1, %2, %cst {dimension_numbers = #tpu.dot_dimension_numbers<[1], [0], [0], [1], [0, 0, 1, 1], [], []>} : vector<128x128xbf16>, vector<128x384xbf16>, vector<128x384xf32> -> vector<128x384xf32>
    %c0_4 = arith.constant 0 : index
    %c0_5 = arith.constant 0 : index
    %4 = vector.load %arg5[%c0_4, %c0_5] : memref<1x384xf32, #tpu.memory_space<vmem>>, vector<1x384xf32>
    %5 = vector.broadcast %4 : vector<1x384xf32> to vector<128x384xf32>
    %6 = arith.addf %3, %5 : vector<128x384xf32>
    %7 = arith.truncf %6 : vector<128x384xf32> to vector<128x384xbf16>
    %c0_6 = arith.constant 0 : index
    %c0_7 = arith.constant 0 : index
    %c0_8 = arith.constant 0 : index
    %8 = vector.load %arg6[%c0_6, %c0_7, %c0_8] : memref<1x128x384xbf16, #tpu.memory_space<vmem>>, vector<1x128x384xbf16>
    %9 = vector.shape_cast %8 : vector<1x128x384xbf16> to vector<128x384xbf16>
    %10 = vector.shape_cast %7 : vector<128x384xbf16> to vector<1x128x384xbf16>
    tpu.vector_store %arg6[%c0_6, %c0_7, %c0_8], %10 {strides = array<i32>} : memref<1x128x384xbf16, #tpu.memory_space<vmem>>, vector<1x128x384xbf16>,
    return
  }
  func.func @transform_0(%arg0: i32, %arg1: i32, %arg2: i32) -> (i32, i32, i32) {
    %c0_i32 = arith.constant 0 : i32
    %c0_i32_0 = arith.constant 0 : i32
    return %arg0, %arg2, %c0_i32 : i32, i32, i32
  }
  func.func @transform_1(%arg0: i32, %arg1: i32, %arg2: i32) -> (i32, i32) {
    %c0_i32 = arith.constant 0 : i32
    %c0_i32_0 = arith.constant 0 : i32
    return %c0_i32, %arg1 : i32, i32
  }
  func.func @transform_2(%arg0: i32, %arg1: i32, %arg2: i32) -> (i32, i32) {
    %c0_i32 = arith.constant 0 : i32
    %c0_i32_0 = arith.constant 0 : i32
    return %c0_i32, %arg1 : i32, i32
  }
  func.func @transform_3(%arg0: i32, %arg1: i32, %arg2: i32) -> (i32, i32, i32) {
    %c0_i32 = arith.constant 0 : i32
    return %arg0, %arg2, %arg1 : i32, i32, i32
  }
}

</mosaic_0001>

<llo_original>
// kernel: tpu_custom_call.1
$region0: #{tpu_custom_call.1}
  #allocation0 [shape = 'u32[]', space=smem, size = 0x4, offset = 0x4, fixed_abs, tag = 'smem constant byte address 0x4 - core index']
  #allocation1 [shape = 'u32[72,128]{1,0:T(1,128)}', space=vmem, size = 0x9000, scoped, tag = 'internal scratch']
  %s0 = inlined_call_operand.hbm [shape: bf16[2,128,128], index: 0, kind: input, shape index: {}]
  %s1 = inlined_call_operand.hbm [shape: bf16[128,384], index: 1, kind: input, shape index: {}]
  %s2 = inlined_call_operand.hbm [shape: f32[1,384], index: 2, kind: input, shape index: {}]
  %s3 = inlined_call_operand.hbm [shape: bf16[2,128,384], index: 3, kind: output, shape index: {}]
  %s4 = sld [smem:[#allocation0]]
  $region57: #{tpu_custom_call.1} parent=0
    _
  %s6 = ssub.s32 1, %s4
  %s7 = scalar_select 0, %s6, %s4
  $region1: #{tpu_custom_call.1} parent=0
    #allocation2 [shape = 'u8[65536]{0}', space=vmem, size = 0x10000, scoped, tag = 'input window, operand 0']
    #allocation3 [shape = 's32[2]{0}', space=sflag, size = 0x8, scoped, tag = 'scoped memory for tpu_custom_call.1']
    #allocation4 [shape = 's32[2]{0}', space=sflag, size = 0x8, scoped, tag = 'scoped memory for tpu_custom_call.1']
    #allocation5 [shape = 'u8[98304]{0}', space=vmem, size = 0x18000, scoped, tag = 'input window, operand 1, single buffered']
    #allocation6 [shape = 's32[1]{0}', space=sflag, size = 0x4, scoped, tag = 'scoped memory for tpu_custom_call.1']
    #allocation7 [shape = 'u8[1536]{0}', space=vmem, size = 0x800, scoped, tag = 'input window, operand 2, single buffered']
    #allocation8 [shape = 'u8[196608]{0}', space=vmem, size = 0x30000, scoped, tag = 'output window, operand 0']
    %8 = vsyncpa [#allocation3], 0
    %s9 = scalar_lea.sflag [#allocation3], 1
    %10 = vsyncpa %s9, 0
    %11 = vsyncpa [#allocation6], 0
    %12 = vsyncpa [#allocation4], 0
    %s13 = scalar_lea.sflag [#allocation4], 1
    %14 = vsyncpa %s13, 0
    loop: start=0, step=1, limit=4
    $region2: #{tpu_custom_call.1} parent=1 // loop_pre_header
      _
    $region3: #{tpu_custom_call.1} parent=1 // loop_header
      %s16 = sphi 0, %s20
      %p17 = scmp.ge.s32.totalorder %s16, 4
      %s23 = sphi 0, %s42
      %s24 = sphi 0, %s38
      %s25 = sphi 0, %s34
      %s26 = sphi 0, %s23
      %s27 = sphi 0, %s24
      %s28 = sphi 0, %s25
      %s29 = sphi 0, %s26
      %s30 = sphi 0, %s27
      %s31 = sphi 0, %s28
      %s47 = sphi 0, %s49
      %s50 = sphi 0, %s47
      %s51 = sphi 0, %s50
      %s67 = sphi 0, %s51
      %s73 = sphi 0, %s75
      %s76 = sphi 0, %s73
      %s77 = sphi 0, %s76
      %s93 = sphi 0, %s77
      %s99 = sphi 0, %s101
      %s102 = sphi 0, %s99
      %s103 = sphi 0, %s102
      %s119 = sphi 0, %s103
      %s129 = sphi 0, %s131
      %s132 = sphi 0, %s129
      %s133 = sphi 0, %s132
      %s149 = sphi 0, %s133
    $region4: #{tpu_custom_call.1} parent=1 // loop_header_branch
      %19 = sbr.rel (%p17) target = $region8
    $region5: #{tpu_custom_call.1} parent=1 // loop_body
      %s21 = ssub.s32 %s16, 1
      %s22 = ssub.s32 %s16, 2
      %s32 = sadd.s32 1, %s25
      %p33 = scmp.ge.s32.totalorder %s32, 1
      %s34 = scalar_select %p33, 0, %s32
      %s35 = sadd.s32 1, %s24
      %s36 = scalar_select %p33, %s35, %s24
      %p37 = scmp.ge.s32.totalorder %s36, 1
      %s38 = scalar_select %p37, 0, %s36
      %s39 = sadd.s32 1, %s23
      %s40 = scalar_select %p37, %s39, %s23
      %p41 = scmp.ge.s32.totalorder %s40, 2
      %s42 = scalar_select %p41, 0, %s40
      %s43 = ssub.s32 %s23, %s42
      %s44 = ssub.s32 %s25, %s34
      %s45 = sor.u32 %s43, %s44
      %p46 = scmp.eq.s32.totalorder %s45, 0
      %s48 = sadd.s32 %s47, 1
      %s49 = scalar_select %p46, %s47, %s48
      %p52 = pneg %p46
      %p53 = scmp.eq.s32.totalorder %s16, 1
      %p54 = por %p52, %p53
      %p55 = scmp.ne.s32.totalorder %s47, %s50
      %p56 = scmp.eq.s32.totalorder %s16, 0
      %p57 = por %p55, %p56
      %p58 = scmp.ne.s32.totalorder %s47, %s50
      %p59 = scmp.eq.s32.totalorder %s21, 1
      %p60 = por %p58, %p59
      %p61 = scmp.ne.s32.totalorder %s50, %s51
      %p62 = scmp.eq.s32.totalorder %s21, 0
      %p63 = por %p61, %p62
      %p64 = scmp.ne.s32.totalorder %s50, %s51
      %p65 = scmp.eq.s32.totalorder %s22, 1
      %p66 = por %p64, %p65
      %p68 = scmp.ne.s32.totalorder %s51, %s67
      %p69 = scmp.eq.s32.totalorder %s22, 0
      %p70 = por %p68, %p69
      %s71 = ssub.s32 %s24, %s38
      %p72 = scmp.eq.s32.totalorder %s71, 0
      %s74 = sadd.s32 %s73, 1
      %s75 = scalar_select %p72, %s73, %s74
      %p78 = pneg %p72
      %p79 = scmp.eq.s32.totalorder %s16, 1
      %p80 = por %p78, %p79
      %p81 = scmp.ne.s32.totalorder %s73, %s76
      %p82 = scmp.eq.s32.totalorder %s16, 0
      %p83 = por %p81, %p82
      %p84 = scmp.ne.s32.totalorder %s73, %s76
      %p85 = scmp.eq.s32.totalorder %s21, 1
      %p86 = por %p84, %p85
      %p87 = scmp.ne.s32.totalorder %s76, %s77
      %p88 = scmp.eq.s32.totalorder %s21, 0
      %p89 = por %p87, %p88
      %p90 = scmp.ne.s32.totalorder %s76, %s77
      %p91 = scmp.eq.s32.totalorder %s22, 1
      %p92 = por %p90, %p91
      %p94 = scmp.ne.s32.totalorder %s77, %s93
      %p95 = scmp.eq.s32.totalorder %s22, 0
      %p96 = por %p94, %p95
      %s97 = ssub.s32 %s24, %s38
      %p98 = scmp.eq.s32.totalorder %s97, 0
      %s100 = sadd.s32 %s99, 1
      %s101 = scalar_select %p98, %s99, %s100
      %p104 = pneg %p98
      %p105 = scmp.eq.s32.totalorder %s16, 1
      %p106 = por %p104, %p105
      %p107 = scmp.ne.s32.totalorder %s99, %s102
      %p108 = scmp.eq.s32.totalorder %s16, 0
      %p109 = por %p107, %p108
      %p110 = scmp.ne.s32.totalorder %s99, %s102
      %p111 = scmp.eq.s32.totalorder %s21, 1
      %p112 = por %p110, %p111
      %p113 = scmp.ne.s32.totalorder %s102, %s103
      %p114 = scmp.eq.s32.totalorder %s21, 0
      %p115 = por %p113, %p114
      %p116 = scmp.ne.s32.totalorder %s102, %s103
      %p117 = scmp.eq.s32.totalorder %s22, 1
      %p118 = por %p116, %p117
      %p120 = scmp.ne.s32.totalorder %s103, %s119
      %p121 = scmp.eq.s32.totalorder %s22, 0
      %p122 = por %p120, %p121
      %s123 = ssub.s32 %s23, %s42
      %s124 = ssub.s32 %s25, %s34
      %s125 = sor.u32 %s123, %s124
      %s126 = ssub.s32 %s24, %s38
      %s127 = sor.u32 %s125, %s126
      %p128 = scmp.eq.s32.totalorder %s127, 0
      %s130 = sadd.s32 %s129, 1
      %s131 = scalar_select %p128, %s129, %s130
      %p134 = pneg %p128
      %p135 = scmp.eq.s32.totalorder %s16, 1
      %p136 = por %p134, %p135
      %p137 = scmp.ne.s32.totalorder %s129, %s132
      %p138 = scmp.eq.s32.totalorder %s16, 0
      %p139 = por %p137, %p138
      %p140 = scmp.ne.s32.totalorder %s129, %s132
      %p141 = scmp.eq.s32.totalorder %s21, 1
      %p142 = por %p140, %p141
      %p143 = scmp.ne.s32.totalorder %s132, %s133
      %p144 = scmp.eq.s32.totalorder %s21, 0
      %p145 = por %p143, %p144
      %p146 = scmp.ne.s32.totalorder %s132, %s133
      %p147 = scmp.eq.s32.totalorder %s22, 1
      %p148 = por %p146, %p147
      %p150 = scmp.ne.s32.totalorder %s133, %s149
      %p151 = scmp.eq.s32.totalorder %s22, 0
      %p152 = por %p150, %p151
      %p153 = scmp.le.s32.totalorder 1, %s16
      %p154 = scmp.lt.s32.totalorder %s16, 3
      %p155 = pnand %p153, %p154
      %p156 = pneg %p155
      // Predicated region
      $region9: #{tpu_custom_call.1} parent=5 // pred_check
        _
      $region10: #{tpu_custom_call.1} parent=5 // pred_check_branch
        %158 = sbr.rel (%p155) target = $region12
      $region11: #{tpu_custom_call.1} parent=5 // pred_region
        %s159 = ssub.s32 %s16, 1
        // Predicated region
        $region13: #{tpu_custom_call.1} parent=11 // pred_check
          %p160 = pneg %p89
        $region14: #{tpu_custom_call.1} parent=11 // pred_check_branch
          %162 = sbr.rel (%p160) target = $region16
        $region15: #{tpu_custom_call.1} parent=11 // pred_region
          %s163 = smul.u32 3, %s27
          %165 = vsyncadd [#allocation6], 0
          %s166 = smul.addr %s163, 4
          %s167 = scalar_lea.hbm %s1, %s166
          %s168 = sshll.u32 %s167, 4
          %s169 = int_to_ptr.hbm [resolvable:$true] %s168
          %s170 = sshll.u32 [#allocation5], 4
          %s171 = int_to_ptr.vmem [resolvable:$true] %s170
          %176 = dma.hbm_to_vmem [thread:$0]  %s169, 3072, %s171, [#allocation6], 192, 192, 12
        $region16: #{tpu_custom_call.1} parent=11 // pred_fallthru
          _
        // Predicated region
        $region17: #{tpu_custom_call.1} parent=11 // pred_check
          %p177 = pneg %p115
        $region18: #{tpu_custom_call.1} parent=11 // pred_check_branch
          %179 = sbr.rel (%p177) target = $region20
        $region19: #{tpu_custom_call.1} parent=11 // pred_region
          %s180 = smul.u32 3, %s27
          %182 = vsyncadd [#allocation6], 0
          %s183 = scalar_lea.hbm %s2, %s180
          %s185 = sshll.u32 %s183, 4
          %s186 = int_to_ptr.hbm [resolvable:$true] %s185
          %s187 = sshll.u32 [#allocation7], 4
          %s188 = int_to_ptr.vmem [resolvable:$true] %s187
          %190 = dma.hbm_to_vmem [thread:$0]  %s186, 48, %s188, [#allocation6]
        $region20: #{tpu_custom_call.1} parent=11 // pred_fallthru
          _
      $region12: #{tpu_custom_call.1} parent=5 // pred_fallthru
        _
      %p191 = scmp.lt.s32.totalorder %s16, 2
      // Predicated region
      $region21: #{tpu_custom_call.1} parent=5 // pred_check
        %p192 = pneg %p191
      $region22: #{tpu_custom_call.1} parent=5 // pred_check_branch
        %194 = sbr.rel (%p192) target = $region24
      $region23: #{tpu_custom_call.1} parent=5 // pred_region
        // Predicated region
        $region25: #{tpu_custom_call.1} parent=23 // pred_check
          %p195 = pneg %p57
        $region26: #{tpu_custom_call.1} parent=23 // pred_check_branch
          %197 = sbr.rel (%p195) target = $region28
        $region27: #{tpu_custom_call.1} parent=23 // pred_region
          %s198 = sand.u32 %s47, 1
          %s199 = scalar_lea.sflag [#allocation3], %s198
          %s200 = sand.u32 %s47, 1
          %s201 = smul.addr %s200, 64
          %s202 = scalar_lea.vmem [#allocation2], %s201
          %s203 = smul.u32 16, %s25
          %205 = vsyncadd %s199, 0
          %s206 = smul.addr %s23, 16
          %s207 = sadd.s32 %s203, %s206
          %s208 = smul.addr %s207, 4
          %s209 = scalar_lea.hbm %s0, %s208
          %s210 = sshll.u32 %s209, 4
          %s211 = int_to_ptr.hbm [resolvable:$true] %s210
          %s212 = sshll.u32 %s202, 4
          %s213 = int_to_ptr.vmem [resolvable:$true] %s212
          %218 = dma.hbm_to_vmem [thread:$0]  %s211, 1024, %s213, %s199, 64, 64, 4
        $region28: #{tpu_custom_call.1} parent=23 // pred_fallthru
          _
      $region24: #{tpu_custom_call.1} parent=5 // pred_fallthru
        _
      %p219 = scmp.le.s32.totalorder 1, %s16
      %p220 = scmp.lt.s32.totalorder %s16, 3
      %p221 = pnand %p219, %p220
      %p222 = pneg %p221
      // Predicated region
      $region29: #{tpu_custom_call.1} parent=5 // pred_check
        _
      $region30: #{tpu_custom_call.1} parent=5 // pred_check_branch
        %224 = sbr.rel (%p221) target = $region32
      $region31: #{tpu_custom_call.1} parent=5 // pred_region
        %s225 = ssub.s32 %s16, 1
        %s226 = sand.u32 %s50, 1
        %s227 = scalar_lea.sflag [#allocation3], %s226
        %s228 = sand.u32 %s50, 1
        %s229 = smul.addr %s228, 64
        %s230 = scalar_lea.vmem [#allocation2], %s229
        // Predicated region
        $region33: #{tpu_custom_call.1} parent=31 // pred_check
          %p231 = pneg %p63
        $region34: #{tpu_custom_call.1} parent=31 // pred_check_branch
          %233 = sbr.rel (%p231) target = $region36
        $region35: #{tpu_custom_call.1} parent=31 // pred_region
          %235 = dma.done %s227, 1024
        $region36: #{tpu_custom_call.1} parent=31 // pred_fallthru
          _
        // Predicated region
        $region37: #{tpu_custom_call.1} parent=31 // pred_check
          %p236 = pneg %p89
        $region38: #{tpu_custom_call.1} parent=31 // pred_check_branch
          %238 = sbr.rel (%p236) target = $region40
        $region39: #{tpu_custom_call.1} parent=31 // pred_region
          %240 = dma.done [#allocation6], 3072
        $region40: #{tpu_custom_call.1} parent=31 // pred_fallthru
          _
        // Predicated region
        $region41: #{tpu_custom_call.1} parent=31 // pred_check
          %p241 = pneg %p115
        $region42: #{tpu_custom_call.1} parent=31 // pred_check_branch
          %243 = sbr.rel (%p241) target = $region44
        $region43: #{tpu_custom_call.1} parent=31 // pred_region
          %245 = dma.done [#allocation6], 48
        $region44: #{tpu_custom_call.1} parent=31 // pred_fallthru
          _
        %s246 = sand.u32 %s50, 1
        %s247 = scalar_lea.sflag [#allocation3], %s246
        %s248 = sand.u32 %s50, 1
        %s249 = smul.addr %s248, 64
        %s250 = scalar_lea.vmem [#allocation2], %s249
        %p251 = pneg %p63
        %p252 = pneg %p60
        %p253 = pneg %p89
        %p254 = pneg %p86
        %p255 = pneg %p115
        %p256 = pneg %p112
        %p257 = pneg %p145
        %p258 = pneg %p142
        %s259 = sand.u32 %s132, 1
        %s260 = scalar_lea.sflag [#allocation4], %s259
        %s261 = sand.u32 %s132, 1
        %s262 = smul.addr %s261, 192
        %s263 = scalar_lea.vmem [#allocation8], %s262
        %s264 = smul.u32 16, %s28
        %s265 = smul.u32 3, %s27
        %s266 = smul.u32 3, %s27
        %s267 = smul.u32 16, %s28
        %s268 = smul.u32 3, %s27
        %v269 = vld [vmem:[%s230] sm:$0xf]
        %v270 = vld [vmem:[%s230 + $0x4] sm:$0xf]
        %v271 = vld [vmem:[%s230 + $0x8] sm:$0xf]
        %v272 = vld [vmem:[%s230 + $0xc] sm:$0xf]
        %v273 = vld [vmem:[%s230 + $0x10] sm:$0xf]
        %v274 = vld [vmem:[%s230 + $0x14] sm:$0xf]
        %v275 = vld [vmem:[%s230 + $0x18] sm:$0xf]
        %v276 = vld [vmem:[%s230 + $0x1c] sm:$0xf]
        %v277 = vld [vmem:[%s230 + $0x20] sm:$0xf]
        %v278 = vld [vmem:[%s230 + $0x24] sm:$0xf]
        %v279 = vld [vmem:[%s230 + $0x28] sm:$0xf]
        %v280 = vld [vmem:[%s230 + $0x2c] sm:$0xf]
        %v281 = vld [vmem:[%s230 + $0x30] sm:$0xf]
        %v282 = vld [vmem:[%s230 + $0x34] sm:$0xf]
        %v283 = vld [vmem:[%s230 + $0x38] sm:$0xf]
        %v284 = vld [vmem:[%s230 + $0x3c] sm:$0xf]
        %v285 = vld [vmem:[#allocation5] sm:$0xff]
        %v286 = vld [vmem:[#allocation5 + $0x8] sm:$0xf]
        %v287 = vld [vmem:[#allocation5 + $0xc] sm:$0xff]
        %v288 = vld [vmem:[#allocation5 + $0x14] sm:$0xf]
        %v289 = vld [vmem:[#allocation5 + $0x18] sm:$0xff]
        %v290 = vld [vmem:[#allocation5 + $0x20] sm:$0xf]
        %v291 = vld [vmem:[#allocation5 + $0x24] sm:$0xff]
        %v292 = vld [vmem:[#allocation5 + $0x2c] sm:$0xf]
        %v293 = vld [vmem:[#allocation5 + $0x30] sm:$0xff]
        %v294 = vld [vmem:[#allocation5 + $0x38] sm:$0xf]
        %v295 = vld [vmem:[#allocation5 + $0x3c] sm:$0xff]
        %v296 = vld [vmem:[#allocation5 + $0x44] sm:$0xf]
        %v297 = vld [vmem:[#allocation5 + $0x48] sm:$0xff]
        %v298 = vld [vmem:[#allocation5 + $0x50] sm:$0xf]
        %v299 = vld [vmem:[#allocation5 + $0x54] sm:$0xff]
        %v300 = vld [vmem:[#allocation5 + $0x5c] sm:$0xf]
        %v301 = vld [vmem:[#allocation5 + $0x60] sm:$0xff]
        %v302 = vld [vmem:[#allocation5 + $0x68] sm:$0xf]
        %v303 = vld [vmem:[#allocation5 + $0x6c] sm:$0xff]
        %v304 = vld [vmem:[#allocation5 + $0x74] sm:$0xf]
        %v305 = vld [vmem:[#allocation5 + $0x78] sm:$0xff]
        %v306 = vld [vmem:[#allocation5 + $0x80] sm:$0xf]
        %v307 = vld [vmem:[#allocation5 + $0x84] sm:$0xff]
        %v308 = vld [vmem:[#allocation5 + $0x8c] sm:$0xf]
        %v309 = vld [vmem:[#allocation5 + $0x90] sm:$0xff]
        %v310 = vld [vmem:[#allocation5 + $0x98] sm:$0xf]
        %v311 = vld [vmem:[#allocation5 + $0x9c] sm:$0xff]
        %v312 = vld [vmem:[#allocation5 + $0xa4] sm:$0xf]
        %v313 = vld [vmem:[#allocation5 + $0xa8] sm:$0xff]
        %v314 = vld [vmem:[#allocation5 + $0xb0] sm:$0xf]
        %v315 = vld [vmem:[#allocation5 + $0xb4] sm:$0xff]
        %v316 = vld [vmem:[#allocation5 + $0xbc] sm:$0xf]
        %v317 = vld [vmem:[#allocation7] sm:$0x7]
        %v319 = vperm.slane %v317, 0
        %v320 = vperm.slane %v317, 1
        %v321 = vperm.slane %v317, 2
        %v341 = vunpack.c.l.b16 %v269
        %v342 = vunpack.c.l.b16 %v270
        %v343 = vunpack.c.l.b16 %v271
        %v344 = vunpack.c.l.b16 %v272
        %v345 = vunpack.c.l.b16 %v273
        %v346 = vunpack.c.l.b16 %v274
        %v347 = vunpack.c.l.b16 %v275
        %v348 = vunpack.c.l.b16 %v276
        %v349 = vunpack.c.l.b16 %v277
        %v350 = vunpack.c.l.b16 %v278
        %v351 = vunpack.c.l.b16 %v279
        %v352 = vunpack.c.l.b16 %v280
        %v353 = vunpack.c.l.b16 %v281
        %v354 = vunpack.c.l.b16 %v282
        %v355 = vunpack.c.l.b16 %v283
        %v356 = vunpack.c.l.b16 %v284
        %v357 = vpack.c.b16 %v342, %v341
        %v358 = vpack.c.b16 %v344, %v343
        %v359 = vpack.c.b16 %v346, %v345
        %v360 = vpack.c.b16 %v348, %v347
        %v361 = vpack.c.b16 %v350, %v349
        %v362 = vpack.c.b16 %v352, %v351
        %v363 = vpack.c.b16 %v354, %v353
        %v364 = vpack.c.b16 %v356, %v355
        %v405 = vunpack.c.l.b16 %v285
        %v406 = vunpack.c.h.b16 %v285
        %v407 = vunpack.c.l.b16 %v286
        %v408 = vunpack.c.l.b16 %v287
        %v409 = vunpack.c.h.b16 %v287
        %v410 = vunpack.c.l.b16 %v288
        %v411 = vunpack.c.l.b16 %v289
        %v412 = vunpack.c.h.b16 %v289
        %v413 = vunpack.c.l.b16 %v290
        %v414 = vunpack.c.l.b16 %v291
        %v415 = vunpack.c.h.b16 %v291
        %v416 = vunpack.c.l.b16 %v292
        %v417 = vunpack.c.l.b16 %v293
        %v418 = vunpack.c.h.b16 %v293
        %v419 = vunpack.c.l.b16 %v294
        %v420 = vunpack.c.l.b16 %v295
        %v421 = vunpack.c.h.b16 %v295
        %v422 = vunpack.c.l.b16 %v296
        %v423 = vunpack.c.l.b16 %v297
        %v424 = vunpack.c.h.b16 %v297
        %v425 = vunpack.c.l.b16 %v298
        %v426 = vunpack.c.l.b16 %v299
        %v427 = vunpack.c.h.b16 %v299
        %v428 = vunpack.c.l.b16 %v300
        %v429 = vunpack.c.l.b16 %v301
        %v430 = vunpack.c.h.b16 %v301
        %v431 = vunpack.c.l.b16 %v302
        %v432 = vunpack.c.l.b16 %v303
        %v433 = vunpack.c.h.b16 %v303
        %v434 = vunpack.c.l.b16 %v304
        %v435 = vunpack.c.l.b16 %v305
        %v436 = vunpack.c.h.b16 %v305
        %v437 = vunpack.c.l.b16 %v306
        %v438 = vunpack.c.l.b16 %v307
        %v439 = vunpack.c.h.b16 %v307
        %v440 = vunpack.c.l.b16 %v308
        %v441 = vunpack.c.l.b16 %v309
        %v442 = vunpack.c.h.b16 %v309
        %v443 = vunpack.c.l.b16 %v310
        %v444 = vunpack.c.l.b16 %v311
        %v445 = vunpack.c.h.b16 %v311
        %v446 = vunpack.c.l.b16 %v312
        %v447 = vunpack.c.l.b16 %v313
        %v448 = vunpack.c.h.b16 %v313
        %v449 = vunpack.c.l.b16 %v314
        %v450 = vunpack.c.l.b16 %v315
        %v451 = vunpack.c.h.b16 %v315
        %v452 = vunpack.c.l.b16 %v316
        %v453 = vpack.c.b16 %v408, %v405
        %v454 = vpack.c.b16 %v409, %v406
        %v455 = vpack.c.b16 %v410, %v407
        %v456 = vpack.c.b16 %v414, %v411
        %v457 = vpack.c.b16 %v415, %v412
        %v458 = vpack.c.b16 %v416, %v413
        %v459 = vpack.c.b16 %v420, %v417
        %v460 = vpack.c.b16 %v421, %v418
        %v461 = vpack.c.b16 %v422, %v419
        %v462 = vpack.c.b16 %v426, %v423
        %v463 = vpack.c.b16 %v427, %v424
        %v464 = vpack.c.b16 %v428, %v425
        %v465 = vpack.c.b16 %v432, %v429
        %v466 = vpack.c.b16 %v433, %v430
        %v467 = vpack.c.b16 %v434, %v431
        %v468 = vpack.c.b16 %v438, %v435
        %v469 = vpack.c.b16 %v439, %v436
        %v470 = vpack.c.b16 %v440, %v437
        %v471 = vpack.c.b16 %v444, %v441
        %v472 = vpack.c.b16 %v445, %v442
        %v473 = vpack.c.b16 %v446, %v443
        %v474 = vpack.c.b16 %v450, %v447
        %v475 = vpack.c.b16 %v451, %v448
        %v476 = vpack.c.b16 %v452, %v449
        %501 = vmatpush.bf16.msra.mxu0 %v474
        %502 = vmatpush.bf16.msra.mxu0 %v471
        %503 = vmatpush.bf16.msra.mxu0 %v468
        %504 = vmatpush.bf16.msra.mxu0 %v465
        %505 = vmatpush.bf16.msra.mxu0 %v462
        %506 = vmatpush.bf16.msra.mxu0 %v459
        %507 = vmatpush.bf16.msra.mxu0 %v456
        %508 = vmatpush.bf16.msra.mxu0 %v453
        %509 = vmatmul.bf16.gmra.mxu0 %v357
        %v510 = vpop.f32.mrf.mxu0
        %v511 = vadd.f32 %v319, %v510
        %v512 = vpop.f32.mrf.mxu0
        %v513 = vadd.f32 %v319, %v512
        %514 = vmatmul.bf16.gmra.mxu0 %v358
        %v515 = vpop.f32.mrf.mxu0
        %v516 = vadd.f32 %v319, %v515
        %v517 = vpop.f32.mrf.mxu0
        %v518 = vadd.f32 %v319, %v517
        %519 = vmatmul.bf16.gmra.mxu0 %v359
        %v520 = vpop.f32.mrf.mxu0
        %v521 = vadd.f32 %v319, %v520
        %v522 = vpop.f32.mrf.mxu0
        %v523 = vadd.f32 %v319, %v522
        %524 = vmatmul.bf16.gmra.mxu0 %v360
        %v525 = vpop.f32.mrf.mxu0
        %v526 = vadd.f32 %v319, %v525
        %v527 = vpop.f32.mrf.mxu0
        %v528 = vadd.f32 %v319, %v527
        %529 = vmatmul.bf16.gmra.mxu0 %v361
        %v530 = vpop.f32.mrf.mxu0
        %v531 = vadd.f32 %v319, %v530
        %v532 = vpop.f32.mrf.mxu0
        %v533 = vadd.f32 %v319, %v532
        %534 = vmatmul.bf16.gmra.mxu0 %v362
        %v535 = vpop.f32.mrf.mxu0
        %v536 = vadd.f32 %v319, %v535
        %v537 = vpop.f32.mrf.mxu0
        %v538 = vadd.f32 %v319, %v537
        %539 = vmatmul.bf16.gmra.mxu0 %v363
        %v540 = vpop.f32.mrf.mxu0
        %v541 = vadd.f32 %v319, %v540
        %v542 = vpop.f32.mrf.mxu0
        %v543 = vadd.f32 %v319, %v542
        %544 = vmatmul.bf16.gmra.mxu0 %v364
        %v545 = vpop.f32.mrf.mxu0
        %v546 = vadd.f32 %v319, %v545
        %v547 = vpop.f32.mrf.mxu0
        %v548 = vadd.f32 %v319, %v547
        %549 = vdwg.mxu0
        %550 = vmatpush.bf16.msra.mxu0 %v475
        %551 = vmatpush.bf16.msra.mxu0 %v472
        %552 = vmatpush.bf16.msra.mxu0 %v469
        %553 = vmatpush.bf16.msra.mxu0 %v466
        %554 = vmatpush.bf16.msra.mxu0 %v463
        %555 = vmatpush.bf16.msra.mxu0 %v460
        %556 = vmatpush.bf16.msra.mxu0 %v457
        %557 = vmatpush.bf16.msra.mxu0 %v454
        %558 = vmatmul.bf16.gmra.mxu0 %v357
        %v559 = vpop.f32.mrf.mxu0
        %v560 = vadd.f32 %v320, %v559
        %v561 = vpop.f32.mrf.mxu0
        %v562 = vadd.f32 %v320, %v561
        %563 = vmatmul.bf16.gmra.mxu0 %v358
        %v564 = vpop.f32.mrf.mxu0
        %v565 = vadd.f32 %v320, %v564
        %v566 = vpop.f32.mrf.mxu0
        %v567 = vadd.f32 %v320, %v566
        %568 = vmatmul.bf16.gmra.mxu0 %v359
        %v569 = vpop.f32.mrf.mxu0
        %v570 = vadd.f32 %v320, %v569
        %v571 = vpop.f32.mrf.mxu0
        %v572 = vadd.f32 %v320, %v571
        %573 = vmatmul.bf16.gmra.mxu0 %v360
        %v574 = vpop.f32.mrf.mxu0
        %v575 = vadd.f32 %v320, %v574
        %v576 = vpop.f32.mrf.mxu0
        %v577 = vadd.f32 %v320, %v576
        %578 = vmatmul.bf16.gmra.mxu0 %v361
        %v579 = vpop.f32.mrf.mxu0
        %v580 = vadd.f32 %v320, %v579
        %v581 = vpop.f32.mrf.mxu0
        %v582 = vadd.f32 %v320, %v581
        %583 = vmatmul.bf16.gmra.mxu0 %v362
        %v584 = vpop.f32.mrf.mxu0
        %v585 = vadd.f32 %v320, %v584
        %v586 = vpop.f32.mrf.mxu0
        %v587 = vadd.f32 %v320, %v586
        %588 = vmatmul.bf16.gmra.mxu0 %v363
        %v589 = vpop.f32.mrf.mxu0
        %v590 = vadd.f32 %v320, %v589
        %v591 = vpop.f32.mrf.mxu0
        %v592 = vadd.f32 %v320, %v591
        %593 = vmatmul.bf16.gmra.mxu0 %v364
        %v594 = vpop.f32.mrf.mxu0
        %v595 = vadd.f32 %v320, %v594
        %v596 = vpop.f32.mrf.mxu0
        %v597 = vadd.f32 %v320, %v596
        %598 = vdwg.mxu0
        %599 = vmatpush.bf16.msra.mxu0 %v476
        %600 = vmatpush.bf16.msra.mxu0 %v473
        %601 = vmatpush.bf16.msra.mxu0 %v470
        %602 = vmatpush.bf16.msra.mxu0 %v467
        %603 = vmatpush.bf16.msra.mxu0 %v464
        %604 = vmatpush.bf16.msra.mxu0 %v461
        %605 = vmatpush.bf16.msra.mxu0 %v458
        %606 = vmatpush.bf16.msra.mxu0 %v455
        %607 = vmatmul.bf16.gmra.mxu0 %v357
        %v608 = vpop.f32.mrf.mxu0
        %v609 = vadd.f32 %v321, %v608
        %v610 = vpop.f32.mrf.mxu0
        %v611 = vadd.f32 %v321, %v610
        %612 = vmatmul.bf16.gmra.mxu0 %v358
        %v613 = vpop.f32.mrf.mxu0
        %v614 = vadd.f32 %v321, %v613
        %v615 = vpop.f32.mrf.mxu0
        %v616 = vadd.f32 %v321, %v615
        %617 = vmatmul.bf16.gmra.mxu0 %v359
        %v618 = vpop.f32.mrf.mxu0
        %v619 = vadd.f32 %v321, %v618
        %v620 = vpop.f32.mrf.mxu0
        %v621 = vadd.f32 %v321, %v620
        %622 = vmatmul.bf16.gmra.mxu0 %v360
        %v623 = vpop.f32.mrf.mxu0
        %v624 = vadd.f32 %v321, %v623
        %v625 = vpop.f32.mrf.mxu0
        %v626 = vadd.f32 %v321, %v625
        %627 = vmatmul.bf16.gmra.mxu0 %v361
        %v628 = vpop.f32.mrf.mxu0
        %v629 = vadd.f32 %v321, %v628
        %v630 = vpop.f32.mrf.mxu0
        %v631 = vadd.f32 %v321, %v630
        %632 = vmatmul.bf16.gmra.mxu0 %v362
        %v633 = vpop.f32.mrf.mxu0
        %v634 = vadd.f32 %v321, %v633
        %v635 = vpop.f32.mrf.mxu0
        %v636 = vadd.f32 %v321, %v635
        %637 = vmatmul.bf16.gmra.mxu0 %v363
        %v638 = vpop.f32.mrf.mxu0
        %v639 = vadd.f32 %v321, %v638
        %v640 = vpop.f32.mrf.mxu0
        %v641 = vadd.f32 %v321, %v640
        %642 = vmatmul.bf16.gmra.mxu0 %v364
        %v643 = vpop.f32.mrf.mxu0
        %v644 = vadd.f32 %v321, %v643
        %v645 = vpop.f32.mrf.mxu0
        %v646 = vadd.f32 %v321, %v645
        %647 = vdwg.mxu0
        %v648 = vpack.c.bf16 %v560, %v511
        %v649 = vpack.c.bf16 %v609, %v609
        %v650 = vpack.c.bf16 %v562, %v513
        %v651 = vpack.c.bf16 %v611, %v611
        %v652 = vpack.c.bf16 %v565, %v516
        %v653 = vpack.c.bf16 %v614, %v614
        %v654 = vpack.c.bf16 %v567, %v518
        %v655 = vpack.c.bf16 %v616, %v616
        %v656 = vpack.c.bf16 %v570, %v521
        %v657 = vpack.c.bf16 %v619, %v619
        %v658 = vpack.c.bf16 %v572, %v523
        %v659 = vpack.c.bf16 %v621, %v621
        %v660 = vpack.c.bf16 %v575, %v526
        %v661 = vpack.c.bf16 %v624, %v624
        %v662 = vpack.c.bf16 %v577, %v528
        %v663 = vpack.c.bf16 %v626, %v626
        %v664 = vpack.c.bf16 %v580, %v531
        %v665 = vpack.c.bf16 %v629, %v629
        %v666 = vpack.c.bf16 %v582, %v533
        %v667 = vpack.c.bf16 %v631, %v631
        %v668 = vpack.c.bf16 %v585, %v536
        %v669 = vpack.c.bf16 %v634, %v634
        %v670 = vpack.c.bf16 %v587, %v538
        %v671 = vpack.c.bf16 %v636, %v636
        %v672 = vpack.c.bf16 %v590, %v541
        %v673 = vpack.c.bf16 %v639, %v639
        %v674 = vpack.c.bf16 %v592, %v543
        %v675 = vpack.c.bf16 %v641, %v641
        %v676 = vpack.c.bf16 %v595, %v546
        %v677 = vpack.c.bf16 %v644, %v644
        %v678 = vpack.c.bf16 %v597, %v548
        %v679 = vpack.c.bf16 %v646, %v646
        %680 = vst [vmem:[%s263] sm:$0xff] %v648
        %681 = vst [vmem:[%s263 + $0x8] sm:$0xf] %v649
        %682 = vst [vmem:[%s263 + $0xc] sm:$0xff] %v650
        %683 = vst [vmem:[%s263 + $0x14] sm:$0xf] %v651
        %684 = vst [vmem:[%s263 + $0x18] sm:$0xff] %v652
        %685 = vst [vmem:[%s263 + $0x20] sm:$0xf] %v653
        %686 = vst [vmem:[%s263 + $0x24] sm:$0xff] %v654
        %687 = vst [vmem:[%s263 + $0x2c] sm:$0xf] %v655
        %688 = vst [vmem:[%s263 + $0x30] sm:$0xff] %v656
        %689 = vst [vmem:[%s263 + $0x38] sm:$0xf] %v657
        %690 = vst [vmem:[%s263 + $0x3c] sm:$0xff] %v658
        %691 = vst [vmem:[%s263 + $0x44] sm:$0xf] %v659
        %692 = vst [vmem:[%s263 + $0x48] sm:$0xff] %v660
        %693 = vst [vmem:[%s263 + $0x50] sm:$0xf] %v661
        %694 = vst [vmem:[%s263 + $0x54] sm:$0xff] %v662
        %695 = vst [vmem:[%s263 + $0x5c] sm:$0xf] %v663
        %696 = vst [vmem:[%s263 + $0x60] sm:$0xff] %v664
        %697 = vst [vmem:[%s263 + $0x68] sm:$0xf] %v665
        %698 = vst [vmem:[%s263 + $0x6c] sm:$0xff] %v666
        %699 = vst [vmem:[%s263 + $0x74] sm:$0xf] %v667
        %700 = vst [vmem:[%s263 + $0x78] sm:$0xff] %v668
        %701 = vst [vmem:[%s263 + $0x80] sm:$0xf] %v669
        %702 = vst [vmem:[%s263 + $0x84] sm:$0xff] %v670
        %703 = vst [vmem:[%s263 + $0x8c] sm:$0xf] %v671
        %704 = vst [vmem:[%s263 + $0x90] sm:$0xff] %v672
        %705 = vst [vmem:[%s263 + $0x98] sm:$0xf] %v673
        %706 = vst [vmem:[%s263 + $0x9c] sm:$0xff] %v674
        %707 = vst [vmem:[%s263 + $0xa4] sm:$0xf] %v675
        %708 = vst [vmem:[%s263 + $0xa8] sm:$0xff] %v676
        %709 = vst [vmem:[%s263 + $0xb0] sm:$0xf] %v677
        %710 = vst [vmem:[%s263 + $0xb4] sm:$0xff] %v678
        %711 = vst [vmem:[%s263 + $0xbc] sm:$0xf] %v679
        %s712 = sand.u32 %s132, 1
        %s713 = scalar_lea.sflag [#allocation4], %s712
        %s714 = sand.u32 %s132, 1
        %s715 = smul.addr %s714, 192
        %s716 = scalar_lea.vmem [#allocation8], %s715
        // Predicated region
        $region45: #{tpu_custom_call.1} parent=31 // pred_check
          %p717 = pneg %p142
        $region46: #{tpu_custom_call.1} parent=31 // pred_check_branch
          %719 = sbr.rel (%p717) target = $region48
        $region47: #{tpu_custom_call.1} parent=31 // pred_region
          %s720 = smul.u32 16, %s28
          %s721 = smul.u32 3, %s27
          %723 = vsyncadd %s713, 0
          %s724 = smul.addr %s720, 3
          %s725 = sadd.s32 %s721, %s724
          %s726 = smul.addr %s26, 48
          %s727 = sadd.s32 %s725, %s726
          %s728 = smul.addr %s727, 4
          %s729 = scalar_lea.hbm %s3, %s728
          %s730 = sshll.u32 %s716, 4
          %s731 = int_to_ptr.vmem [resolvable:$true] %s730
          %s732 = sshll.u32 %s729, 4
          %s733 = int_to_ptr.hbm [resolvable:$true] %s732
          %738 = dma.vmem_to_hbm [thread:$0]  %s731, 3072, %s733, %s713, 192, 192, 12
        $region48: #{tpu_custom_call.1} parent=31 // pred_fallthru
          _
      $region32: #{tpu_custom_call.1} parent=5 // pred_fallthru
        _
      %p739 = scmp.le.s32.totalorder 2, %s16
      // Predicated region
      $region49: #{tpu_custom_call.1} parent=5 // pred_check
        %p740 = pneg %p739
      $region50: #{tpu_custom_call.1} parent=5 // pred_check_branch
        %742 = sbr.rel (%p740) target = $region52
      $region51: #{tpu_custom_call.1} parent=5 // pred_region
        %s743 = ssub.s32 %s16, 2
        // Predicated region
        $region53: #{tpu_custom_call.1} parent=51 // pred_check
          %p744 = pneg %p148
        $region54: #{tpu_custom_call.1} parent=51 // pred_check_branch
          %746 = sbr.rel (%p744) target = $region56
        $region55: #{tpu_custom_call.1} parent=51 // pred_region
          %s747 = sand.u32 %s133, 1
          %s748 = scalar_lea.sflag [#allocation4], %s747
          %s749 = sand.u32 %s133, 1
          %s750 = smul.addr %s749, 192
          %s751 = scalar_lea.vmem [#allocation8], %s750
          %753 = dma.done %s748, 3072
        $region56: #{tpu_custom_call.1} parent=51 // pred_fallthru
          _
      $region52: #{tpu_custom_call.1} parent=5 // pred_fallthru
        _
    $region6: #{tpu_custom_call.1} parent=1 // loop_footer
      %s20 = sadd.s32 1, %s16
    $region7: #{tpu_custom_call.1} parent=1 // loop_footer_branch
      %15 = sbr.rel target = $region3
    $region8: #{tpu_custom_call.1} parent=1 // loop_exit
      _
    %754 = vsyncpa [#allocation3], 1
    %s755 = scalar_lea.sflag [#allocation3], 1
    %756 = vsyncpa %s755, 1
    %757 = vsyncpa [#allocation6], 1
    %758 = vsyncpa [#allocation4], 1
    %s759 = scalar_lea.sflag [#allocation4], 1
    %760 = vsyncpa %s759, 1

</llo_original>
